<compile_context>
chip_gen: v7x
topology: tpu7x:2x2x1
jax: 0.10.0
libtpu: 0.0.40
codegen_flags: <defaults>
</compile_context>

<pallas_src>
import functools

import jax
import jax.numpy as jnp
from jax.experimental import pallas as pl
from jax.experimental.pallas import tpu as pltpu


# ---------------------------------------------------------------------------
# Kernel
# ---------------------------------------------------------------------------
def _make_kernel(acts):
    """Fused MLP chain.  Layer 0 consumes the combined [y | x_t | 0] slab plus
    the SMEM scalar t; silu where acts[i] (0.909 pre-folded into next W)."""
    n = len(acts)

    def kernel(t_ref, yx_ref, *refs):
        out_ref = refs[-1]
        w_t, w_in, b0 = refs[0], refs[1], refs[2]
        t = t_ref[0, 0]                                  # f32 scalar from SMEM

        # Layer 0 (linear_in), fused:
        #   cat([t, y, x_t]) @ W0 + b0 == [y|x_t|0] @ [W_y;W_x;0] + t*w_t + b0
        h = jnp.dot(yx_ref[...].astype(w_in.dtype), w_in[...],
                    preferred_element_type=jnp.float32)
        h = h + t * w_t[...] + b0[...]                   # w_t, b0 kept f32
        if acts[0]:
            h = h * jax.nn.sigmoid(h)

        for i in range(1, n):
            w = refs[3 + 2 * (i - 1)]
            b = refs[4 + 2 * (i - 1)]
            h = jnp.dot(h.astype(w.dtype), w[...],
                        preferred_element_type=jnp.float32)
            h = h + b[...]                               # biases kept f32
            if acts[i]:
                # LipSwish = 0.909 * silu(x); the 0.909 was folded into the
                # following layer's weights at prep time, only silu remains.
                h = h * jax.nn.sigmoid(h)

        out_ref[...] = h.astype(out_ref.dtype)

    return kernel


# ---------------------------------------------------------------------------
# Parameters
# ---------------------------------------------------------------------------
def init_neural_ode_func_params(key, input_dim, hidden_dim, hidden_hidden_dim,
                                num_layers, dtype=jnp.float32):
    """Original-shape params mirroring NeuralODEFunc.__init__ (W stored (in, out))."""
    layer_dims = [(1 + hidden_dim + input_dim, hidden_dim, False),
                  (hidden_dim, hidden_hidden_dim, True)]
    for _ in range(num_layers - 1):
        layer_dims.append((hidden_hidden_dim, hidden_hidden_dim, True))
    layer_dims.append((hidden_hidden_dim, hidden_dim, False))

    layers, acts = [], []
    for (fan_in, fan_out, act) in layer_dims:
        key, kw, kb = jax.random.split(key, 3)
        bound = 1.0 / jnp.sqrt(jnp.asarray(fan_in, dtype))
        w = jax.random.uniform(kw, (fan_in, fan_out), dtype, -bound, bound)
        b = jax.random.uniform(kb, (fan_out,), dtype, -bound, bound)
        layers.append((w, b))
        acts.append(act)
    return {"layers": layers, "acts": tuple(acts)}


def _round_up(x, m):
    return ((x + m - 1) // m) * m


def _rup_width(d):
    """Lane-dense layer widths: 128 for widths <= 128, else a multiple of 256
    so each MXU pass fills the full 256-wide array on v6e/v7x."""
    return 128 if d <= 128 else _round_up(d, 256)


def prepare_kernel_params(params, compute_dtype=jnp.float32, out_dtype=None):
    """Split / pad / fold the original params into the kernel layout.

    flat[0] w_t  (1, P0)          f32     t-column of linear_in
    flat[1] w_in (in_pad, P0)     cdt     [W_y ; W_x ; 0] stacked (one matmul)
    flat[2] b0   (1, P0)          f32
    flat[3+2i]   W_i (P_{i-1},P_i) cdt    flat[4+2i] b_i (1, P_i) f32
    Biases and w_t stay f32 even on the bf16 path (VPU-only, never touch MXU).
    """
    layers = params["layers"]
    acts = tuple(params["acts"])
    n = len(layers)
    Ws = [w for (w, _) in layers]
    Bs = [b for (_, b) in layers]

    # Fold LipSwish's 0.909 into the next layer's weights (exact reassociation).
    assert not acts[-1], "last layer must be linear"
    for i in range(n - 1):
        if acts[i]:
            Ws[i + 1] = Ws[i + 1] * jnp.asarray(0.909, Ws[i + 1].dtype)

    hidden_dim = int(Ws[-1].shape[1])
    input_dim = int(Ws[0].shape[0]) - 1 - hidden_dim
    assert input_dim > 0, "linear_in fan_in mismatch"

    def pad2(w, rows, cols):
        return jnp.pad(w, ((0, rows - w.shape[0]), (0, cols - w.shape[1])))

    W0, b0 = Ws[0], Bs[0]
    P0 = _rup_width(W0.shape[1])
    in_pad = _rup_width(hidden_dim + input_dim)

    w_t = pad2(W0[0:1, :], 1, P0).astype(jnp.float32)
    # Rows [0,H) = W_y, rows [H,H+I) = W_x, rest zero: the wrapper only has to
    # drop x_t into the zero-padded lanes [H, H+I) of the y slab.
    w_in = pad2(W0[1:, :], in_pad, P0).astype(compute_dtype)
    b0p = pad2(b0.reshape(1, -1), 1, P0).astype(jnp.float32)

    flat = [w_t, w_in, b0p]
    prev_pad = P0
    for i in range(1, n):
        W, b = Ws[i], Bs[i]
        Pi = _rup_width(W.shape[1])
        flat.append(pad2(W, prev_pad, Pi).astype(compute_dtype))
        flat.append(pad2(b.reshape(1, -1), 1, Pi).astype(jnp.float32))
        prev_pad = Pi

    out_dtype = compute_dtype if out_dtype is None else out_dtype
    return {"flat": tuple(flat), "acts": acts,
            "hidden_dim": hidden_dim, "input_dim": input_dim,
            "in_pad": int(in_pad), "out_pad": int(prev_pad),
            "compute_dtype": compute_dtype, "out_dtype": out_dtype}


# ---------------------------------------------------------------------------
# pallas_call wrapper
# ---------------------------------------------------------------------------
def _pick_tile(batch, compute_dtype):
    """Largest lane-aligned batch tile (<=512) with a partial final block; keep
    >=2 grid steps when possible so v7x's two TensorCores both get work; tb>=16
    on the bf16 path so packed (16,128) bf16 vregs are full."""
    m = 16 if jnp.dtype(compute_dtype) == jnp.dtype(jnp.bfloat16) else 8
    tb = min(512, _round_up(batch, m))
    if batch > m:                                   # leave >=2 grid steps (v7x)
        tb = min(tb, _round_up(-(-batch // 2), m))
    tb = min(tb, _round_up(batch, 8))               # never exceed 8-aligned extent
    return max(tb, 8)


def _vmem_limit_bytes(tb, in_pad, out_pad, flat, out_dtype):
    """Explicit scoped-VMEM budget: pipelined activation tiles + resident
    weights + headroom, clamped to v7x's 64 MiB physical VMEM."""
    in_bytes = 2 * tb * in_pad * 4                                # f32 input slab
    out_bytes = 2 * tb * out_pad * jnp.dtype(out_dtype).itemsize
    w_bytes = sum(int(p.size) * jnp.dtype(p.dtype).itemsize for p in flat)
    max_w = max(int(p.shape[-1]) for p in flat)
    scratch = 4 * tb * max_w * 4                                  # intermediates
    need = in_bytes + out_bytes + 2 * w_bytes + scratch + (4 << 20)
    return int(min(max(need, 32 << 20), 64 << 20))


def _const_spec(shape):
    """VMEM-resident param block (constant index_map); single-buffered when the
    running Pallas build supports pipeline_mode=pl.Buffered(1)."""
    idx = lambda i: (0, 0)
    if hasattr(pl, "Buffered"):
        try:
            return pl.BlockSpec(shape, idx, pipeline_mode=pl.Buffered(1))
        except TypeError:
            pass
    return pl.BlockSpec(shape, idx)


def _run_kernel(t_arr, yx, flat, acts, tb, out_dtype):
    B, in_pad = yx.shape
    out_pad = int(flat[-1].shape[1])
    kernel = _make_kernel(acts)
    weight_specs = [_const_spec(tuple(p.shape)) for p in flat]

    return pl.pallas_call(
        kernel,
        out_shape=jax.ShapeDtypeStruct((B, out_pad), out_dtype),
        grid=(pl.cdiv(B, tb),),
        in_specs=[
            pl.BlockSpec((1, 1), lambda i: (0, 0),
                         memory_space=pltpu.MemorySpace.SMEM),    # scalar t
            pl.BlockSpec((tb, in_pad), lambda i: (i, 0)),         # [y|x_t|0] tile
            *weight_specs,                                        # resident params
        ],
        out_specs=pl.BlockSpec((tb, out_pad), lambda i: (i, 0)),  # lane-dense out
        compiler_params=pltpu.CompilerParams(
            dimension_semantics=("parallel",),
            vmem_limit_bytes=_vmem_limit_bytes(tb, in_pad, out_pad, flat,
                                               out_dtype)),
    )(t_arr, yx, *flat)


@functools.partial(jax.jit, static_argnames=("acts", "tb", "out_dtype"))
def _fwd_unpadded(t_arr, y, x_t, flat, acts, tb, out_dtype):
    H, I = y.shape[1], x_t.shape[1]
    in_pad = flat[1].shape[0]
    yx = jnp.concatenate([y, x_t], axis=-1).astype(jnp.float32)
    yx = jnp.pad(yx, ((0, 0), (0, in_pad - H - I)))
    out = _run_kernel(t_arr, yx, flat, acts, tb, out_dtype)
    return out[:, :H]     # module-exact shape; use the padded path to skip this


@functools.partial(jax.jit,
                   static_argnames=("acts", "tb", "out_dtype", "hidden_dim"))
def _fwd_padded(t_arr, y_pad, x_t, flat, acts, tb, out_dtype, hidden_dim):
    in_pad = flat[1].shape[0]
    y_pad = y_pad.astype(jnp.float32)
    if y_pad.shape[1] < in_pad:
        y_pad = jnp.pad(y_pad, ((0, 0), (0, in_pad - y_pad.shape[1])))
    # x_t drops into the (zero) padded lanes [H, H+I) of the state slab.
    yx = jax.lax.dynamic_update_slice(y_pad, x_t.astype(jnp.float32),
                                      (0, hidden_dim))
    return _run_kernel(t_arr, yx, flat, acts, tb, out_dtype)


def neural_ode_func_forward(t, y, x_t, kparams):
    """NeuralODEFunc.forward(t, y), x_t = X.evaluate(t) given directly.
    Returns (B, hidden_dim), exactly like the PyTorch module."""
    t_arr = jnp.asarray(t, dtype=jnp.float32).reshape(1, 1)
    tb = _pick_tile(y.shape[0], kparams["compute_dtype"])
    return _fwd_unpadded(t_arr, y, x_t, kparams["flat"], kparams["acts"], tb,
                         kparams["out_dtype"])


def neural_ode_func_forward_padded(t, y_padded, x_t, kparams):
    """Perf entry point: y carried lane-padded as (B, out_pad); returns the
    lane-dense padded slab (no post-kernel slice).  Padded lanes stay exactly
    zero, so the ODE solver can feed the output straight back in as state."""
    t_arr = jnp.asarray(t, dtype=jnp.float32).reshape(1, 1)
    tb = _pick_tile(y_padded.shape[0], kparams["compute_dtype"])
    return _fwd_padded(t_arr, y_padded, x_t, kparams["flat"], kparams["acts"],
                       tb, kparams["out_dtype"], kparams["hidden_dim"])


# ---------------------------------------------------------------------------
# Pure-JAX reference (original module semantics, unpadded / unfolded params)
# ---------------------------------------------------------------------------
def _reference_forward(t, y, x_t, params):
    t_col = jnp.full((y.shape[0], 1), jnp.float32(t), dtype=jnp.float32)
    x = jnp.concatenate([t_col, y, x_t], axis=-1)
    for (w, b), act in zip(params["layers"], params["acts"]):
        x = x @ w + b
        if act:
            x = 0.909 * x * jax.nn.sigmoid(x)
    return x


if __name__ == "__main__":
    batch = 10          # deliberately not a multiple of 8: exercises partial block
    input_dim = 4
    hidden_dim = 32
    hidden_hidden_dim = 32
    num_layers = 2

    key = jax.random.PRNGKey(0)
    kp, ky, kx = jax.random.split(key, 3)

    params = init_neural_ode_func_params(
        kp, input_dim, hidden_dim, hidden_hidden_dim, num_layers)

    t = 0.37
    y = jax.random.normal(ky, (batch, hidden_dim), dtype=jnp.float32)
    x_t = jax.random.normal(kx, (batch, input_dim), dtype=jnp.float32)

    ref = _reference_forward(t, y, x_t, params)

    # f32 path, module-exact output shape: tight correctness check.
    kp32 = prepare_kernel_params(params, compute_dtype=jnp.float32)
    out = jax.block_until_ready(neural_ode_func_forward(t, y, x_t, kp32))
    assert out.shape == (batch, hidden_dim)
    assert jnp.allclose(out, ref, atol=1e-4, rtol=1e-4), "f32 mismatch vs reference"

    # f32 padded-state path (no post-kernel slice; padded lanes stay ~0).
    out_pad = kp32["out_pad"]
    y_padded = jnp.pad(y, ((0, 0), (0, out_pad - hidden_dim)))
    slab = jax.block_until_ready(
        neural_ode_func_forward_padded(t, y_padded, x_t, kp32))
    assert slab.shape == (batch, out_pad)
    assert jnp.allclose(slab[:, :hidden_dim], ref, atol=1e-4, rtol=1e-4), \
        "padded-path mismatch vs reference"
    assert jnp.allclose(slab[:, hidden_dim:], 0.0, atol=1e-6), \
        "padded lanes not zero"

    # bf16 MXU weights + bf16 output (v6e/v5e bandwidth path); f32 biases,
    # f32 accumulation and f32 eltwise math; loose check.
    kpbf = prepare_kernel_params(params, compute_dtype=jnp.bfloat16,
                                 out_dtype=jnp.bfloat16)
    out_bf = jax.block_until_ready(neural_ode_func_forward(t, y, x_t, kpbf))
    assert out_bf.shape == (batch, hidden_dim)
    assert jnp.allclose(out_bf.astype(jnp.float32), ref, atol=3e-1, rtol=3e-1), \
        "bf16 mismatch vs reference"

    print("KERNEL_OK")
</pallas_src>

<mosaic_0001>
module attributes {stable_mosaic.version = 11 : i64} {
  func.func @kernel(%arg0: i32, %arg1: memref<1x1xf32, #tpu.memory_space<smem>>, %arg2: memref<8x128xf32, #tpu.memory_space<vmem>>, %arg3: memref<1x128xf32, #tpu.memory_space<vmem>>, %arg4: memref<128x128xf32, #tpu.memory_space<vmem>>, %arg5: memref<1x128xf32, #tpu.memory_space<vmem>>, %arg6: memref<128x128xf32, #tpu.memory_space<vmem>>, %arg7: memref<1x128xf32, #tpu.memory_space<vmem>>, %arg8: memref<128x128xf32, #tpu.memory_space<vmem>>, %arg9: memref<1x128xf32, #tpu.memory_space<vmem>>, %arg10: memref<128x128xf32, #tpu.memory_space<vmem>>, %arg11: memref<1x128xf32, #tpu.memory_space<vmem>>, %arg12: memref<8x128xf32, #tpu.memory_space<vmem>>) attributes {dimension_semantics = [#tpu.dimension_semantics<parallel>], iteration_bounds = array<i64: 2>, scalar_prefetch = 0 : i64, scratch_operands = 0 : i64, tpu.core_type = #tpu.core_type<tc>, window_params = [{transform_indices = @transform_0, window_bounds = array<i64: 1, 1>}, {transform_indices = @transform_1, window_bounds = array<i64: 8, 128>}, {pipeline_mode = #tpu.pipeline_mode<synchronous>, transform_indices = @transform_2, window_bounds = array<i64: 1, 128>}, {pipeline_mode = #tpu.pipeline_mode<synchronous>, transform_indices = @transform_3, window_bounds = array<i64: 128, 128>}, {pipeline_mode = #tpu.pipeline_mode<synchronous>, transform_indices = @transform_4, window_bounds = array<i64: 1, 128>}, {pipeline_mode = #tpu.pipeline_mode<synchronous>, transform_indices = @transform_5, window_bounds = array<i64: 128, 128>}, {pipeline_mode = #tpu.pipeline_mode<synchronous>, transform_indices = @transform_6, window_bounds = array<i64: 1, 128>}, {pipeline_mode = #tpu.pipeline_mode<synchronous>, transform_indices = @transform_7, window_bounds = array<i64: 128, 128>}, {pipeline_mode = #tpu.pipeline_mode<synchronous>, transform_indices = @transform_8, window_bounds = array<i64: 1, 128>}, {pipeline_mode = #tpu.pipeline_mode<synchronous>, transform_indices = @transform_9, window_bounds = array<i64: 128, 128>}, {pipeline_mode = #tpu.pipeline_mode<synchronous>, transform_indices = @transform_10, window_bounds = array<i64: 1, 128>}, {transform_indices = @transform_11, window_bounds = array<i64: 8, 128>}]} {
    %c0 = arith.constant 0 : index
    %c0_0 = arith.constant 0 : index
    %0 = memref.load %arg1[%c0, %c0_0] : memref<1x1xf32, #tpu.memory_space<smem>>
    %c0_1 = arith.constant 0 : index
    %c0_2 = arith.constant 0 : index
    %1 = vector.load %arg2[%c0_1, %c0_2] : memref<8x128xf32, #tpu.memory_space<vmem>>, vector<8x128xf32>
    %c0_3 = arith.constant 0 : index
    %c0_4 = arith.constant 0 : index
    %2 = vector.load %arg4[%c0_3, %c0_4] : memref<128x128xf32, #tpu.memory_space<vmem>>, vector<128x128xf32>
    %cst = arith.constant dense<0.000000e+00> : vector<8x128xf32>
    %3 = tpu.matmul %1, %2, %cst {dimension_numbers = #tpu.dot_dimension_numbers<[1], [0], [0], [1], [0, 0, 1, 1], [], []>} : vector<8x128xf32>, vector<128x128xf32>, vector<8x128xf32> -> vector<8x128xf32>
    %c0_5 = arith.constant 0 : index
    %c0_6 = arith.constant 0 : index
    %4 = vector.load %arg3[%c0_5, %c0_6] : memref<1x128xf32, #tpu.memory_space<vmem>>, vector<1x128xf32>
    %5 = vector.broadcast %0 : f32 to vector<1x128xf32>
    %6 = arith.mulf %5, %4 : vector<1x128xf32>
    %7 = vector.broadcast %6 : vector<1x128xf32> to vector<8x128xf32>
    %8 = arith.addf %3, %7 : vector<8x128xf32>
    %c0_7 = arith.constant 0 : index
    %c0_8 = arith.constant 0 : index
    %9 = vector.load %arg5[%c0_7, %c0_8] : memref<1x128xf32, #tpu.memory_space<vmem>>, vector<1x128xf32>
    %10 = vector.broadcast %9 : vector<1x128xf32> to vector<8x128xf32>
    %11 = arith.addf %8, %10 : vector<8x128xf32>
    %c0_9 = arith.constant 0 : index
    %c0_10 = arith.constant 0 : index
    %12 = vector.load %arg6[%c0_9, %c0_10] : memref<128x128xf32, #tpu.memory_space<vmem>>, vector<128x128xf32>
    %cst_11 = arith.constant dense<0.000000e+00> : vector<8x128xf32>
    %13 = tpu.matmul %11, %12, %cst_11 {dimension_numbers = #tpu.dot_dimension_numbers<[1], [0], [0], [1], [0, 0, 1, 1], [], []>} : vector<8x128xf32>, vector<128x128xf32>, vector<8x128xf32> -> vector<8x128xf32>
    %c0_12 = arith.constant 0 : index
    %c0_13 = arith.constant 0 : index
    %14 = vector.load %arg7[%c0_12, %c0_13] : memref<1x128xf32, #tpu.memory_space<vmem>>, vector<1x128xf32>
    %15 = vector.broadcast %14 : vector<1x128xf32> to vector<8x128xf32>
    %16 = arith.addf %13, %15 : vector<8x128xf32>
    %17 = arith.negf %16 : vector<8x128xf32>
    %18 = math.exp %17 : vector<8x128xf32>
    %cst_14 = arith.constant 1.000000e+00 : f32
    %19 = vector.broadcast %cst_14 : f32 to vector<8x128xf32>
    %20 = arith.addf %19, %18 : vector<8x128xf32>
    %21 = arith.divf %19, %20 : vector<8x128xf32>
    %22 = arith.mulf %16, %21 : vector<8x128xf32>
    %c0_15 = arith.constant 0 : index
    %c0_16 = arith.constant 0 : index
    %23 = vector.load %arg8[%c0_15, %c0_16] : memref<128x128xf32, #tpu.memory_space<vmem>>, vector<128x128xf32>
    %cst_17 = arith.constant dense<0.000000e+00> : vector<8x128xf32>
    %24 = tpu.matmul %22, %23, %cst_17 {dimension_numbers = #tpu.dot_dimension_numbers<[1], [0], [0], [1], [0, 0, 1, 1], [], []>} : vector<8x128xf32>, vector<128x128xf32>, vector<8x128xf32> -> vector<8x128xf32>
    %c0_18 = arith.constant 0 : index
    %c0_19 = arith.constant 0 : index
    %25 = vector.load %arg9[%c0_18, %c0_19] : memref<1x128xf32, #tpu.memory_space<vmem>>, vector<1x128xf32>
    %26 = vector.broadcast %25 : vector<1x128xf32> to vector<8x128xf32>
    %27 = arith.addf %24, %26 : vector<8x128xf32>
    %28 = arith.negf %27 : vector<8x128xf32>
    %29 = math.exp %28 : vector<8x128xf32>
    %cst_20 = arith.constant 1.000000e+00 : f32
    %30 = vector.broadcast %cst_20 : f32 to vector<8x128xf32>
    %31 = arith.addf %30, %29 : vector<8x128xf32>
    %32 = arith.divf %30, %31 : vector<8x128xf32>
    %33 = arith.mulf %27, %32 : vector<8x128xf32>
    %c0_21 = arith.constant 0 : index
    %c0_22 = arith.constant 0 : index
    %34 = vector.load %arg10[%c0_21, %c0_22] : memref<128x128xf32, #tpu.memory_space<vmem>>, vector<128x128xf32>
    %cst_23 = arith.constant dense<0.000000e+00> : vector<8x128xf32>
    %35 = tpu.matmul %33, %34, %cst_23 {dimension_numbers = #tpu.dot_dimension_numbers<[1], [0], [0], [1], [0, 0, 1, 1], [], []>} : vector<8x128xf32>, vector<128x128xf32>, vector<8x128xf32> -> vector<8x128xf32>
    %c0_24 = arith.constant 0 : index
    %c0_25 = arith.constant 0 : index
    %36 = vector.load %arg11[%c0_24, %c0_25] : memref<1x128xf32, #tpu.memory_space<vmem>>, vector<1x128xf32>
    %37 = vector.broadcast %36 : vector<1x128xf32> to vector<8x128xf32>
    %38 = arith.addf %35, %37 : vector<8x128xf32>
    %c0_26 = arith.constant 0 : index
    %c0_27 = arith.constant 0 : index
    %39 = vector.load %arg12[%c0_26, %c0_27] : memref<8x128xf32, #tpu.memory_space<vmem>>, vector<8x128xf32>
    tpu.vector_store %arg12[%c0_26, %c0_27], %38 {strides = array<i32>} : memref<8x128xf32, #tpu.memory_space<vmem>>, vector<8x128xf32>,
    return
  }
  func.func @transform_0(%arg0: i32) -> (i32, i32) {
    %c0_i32 = arith.constant 0 : i32
    %c0_i32_0 = arith.constant 0 : i32
    %c0_i32_1 = arith.constant 0 : i32
    return %c0_i32, %c0_i32_0 : i32, i32
  }
  func.func @transform_1(%arg0: i32) -> (i32, i32) {
    %c0_i32 = arith.constant 0 : i32
    %c0_i32_0 = arith.constant 0 : i32
    return %arg0, %c0_i32 : i32, i32
  }
  func.func @transform_2(%arg0: i32) -> (i32, i32) {
    %c0_i32 = arith.constant 0 : i32
    %c0_i32_0 = arith.constant 0 : i32
    %c0_i32_1 = arith.constant 0 : i32
    return %c0_i32, %c0_i32_0 : i32, i32
  }
  func.func @transform_3(%arg0: i32) -> (i32, i32) {
    %c0_i32 = arith.constant 0 : i32
    %c0_i32_0 = arith.constant 0 : i32
    %c0_i32_1 = arith.constant 0 : i32
    return %c0_i32, %c0_i32_0 : i32, i32
  }
  func.func @transform_4(%arg0: i32) -> (i32, i32) {
    %c0_i32 = arith.constant 0 : i32
    %c0_i32_0 = arith.constant 0 : i32
    %c0_i32_1 = arith.constant 0 : i32
    return %c0_i32, %c0_i32_0 : i32, i32
  }
  func.func @transform_5(%arg0: i32) -> (i32, i32) {
    %c0_i32 = arith.constant 0 : i32
    %c0_i32_0 = arith.constant 0 : i32
    %c0_i32_1 = arith.constant 0 : i32
    return %c0_i32, %c0_i32_0 : i32, i32
  }
  func.func @transform_6(%arg0: i32) -> (i32, i32) {
    %c0_i32 = arith.constant 0 : i32
    %c0_i32_0 = arith.constant 0 : i32
    %c0_i32_1 = arith.constant 0 : i32
    return %c0_i32, %c0_i32_0 : i32, i32
  }
  func.func @transform_7(%arg0: i32) -> (i32, i32) {
    %c0_i32 = arith.constant 0 : i32
    %c0_i32_0 = arith.constant 0 : i32
    %c0_i32_1 = arith.constant 0 : i32
    return %c0_i32, %c0_i32_0 : i32, i32
  }
  func.func @transform_8(%arg0: i32) -> (i32, i32) {
    %c0_i32 = arith.constant 0 : i32
    %c0_i32_0 = arith.constant 0 : i32
    %c0_i32_1 = arith.constant 0 : i32
    return %c0_i32, %c0_i32_0 : i32, i32
  }
  func.func @transform_9(%arg0: i32) -> (i32, i32) {
    %c0_i32 = arith.constant 0 : i32
    %c0_i32_0 = arith.constant 0 : i32
    %c0_i32_1 = arith.constant 0 : i32
    return %c0_i32, %c0_i32_0 : i32, i32
  }
  func.func @transform_10(%arg0: i32) -> (i32, i32) {
    %c0_i32 = arith.constant 0 : i32
    %c0_i32_0 = arith.constant 0 : i32
    %c0_i32_1 = arith.constant 0 : i32
    return %c0_i32, %c0_i32_0 : i32, i32
  }
  func.func @transform_11(%arg0: i32) -> (i32, i32) {
    %c0_i32 = arith.constant 0 : i32
    %c0_i32_0 = arith.constant 0 : i32
    return %arg0, %c0_i32 : i32, i32
  }
}

</mosaic_0001>

<llo_original>
// kernel: _fwd_unpadded.1
$region0: #{_fwd_unpadded.1}
  #allocation0 [shape = 'u32[]', space=smem, size = 0x4, offset = 0x4, fixed_abs, tag = 'smem constant byte address 0x4 - core index']
  #allocation1 [shape = 'u32[144,128]{1,0:T(1,128)}', space=vmem, size = 0x12000, scoped, tag = 'internal scratch']
  #allocation2 [shape = 'f32[1,1]{1,0:T(1,128)S(6)}', space=smem, size = 0x200, scoped, tag = 'scoped memory for _fwd_unpadded.1']
  %s0 = inlined_call_operand.<no memory space> [shape: f32[1,1], index: 0, kind: input, shape index: {}]
  %s1 = inlined_call_operand.vmem [shape: f32[10,128], index: 1, kind: input, shape index: {}]
  %s2 = inlined_call_operand.vmem [shape: f32[1,128], index: 2, kind: input, shape index: {}]
  %s3 = inlined_call_operand.hbm [shape: f32[128,128], index: 3, kind: input, shape index: {}]
  %s4 = inlined_call_operand.vmem [shape: f32[1,128], index: 4, kind: input, shape index: {}]
  %s5 = inlined_call_operand.hbm [shape: f32[128,128], index: 5, kind: input, shape index: {}]
  %s6 = inlined_call_operand.vmem [shape: f32[1,128], index: 6, kind: input, shape index: {}]
  %s7 = inlined_call_operand.hbm [shape: f32[128,128], index: 7, kind: input, shape index: {}]
  %s8 = inlined_call_operand.vmem [shape: f32[1,128], index: 8, kind: input, shape index: {}]
  %s9 = inlined_call_operand.hbm [shape: f32[128,128], index: 9, kind: input, shape index: {}]
  %s10 = inlined_call_operand.vmem [shape: f32[1,128], index: 10, kind: input, shape index: {}]
  %s11 = inlined_call_operand.hbm [shape: f32[10,128], index: 11, kind: output, shape index: {}]
  %s12 = sld [smem:[#allocation0]]
  $region93: #{_fwd_unpadded.1} parent=0
    _
  %s14 = ssub.s32 1, %s12
  %s15 = scalar_select 0, %s14, %s12
  %16 = sst [smem:[#allocation2]] %s0
  $region1: #{_fwd_unpadded.1} parent=0
    #allocation3 [shape = 'u8[65536]{0}', space=vmem, size = 0x10000, scoped, tag = 'input window, operand 3, single buffered']
    #allocation4 [shape = 's32[2]{0}', space=sflag, size = 0x8, scoped, tag = 'scoped memory for _fwd_unpadded.1']
    #allocation5 [shape = 's32[2]{0}', space=sflag, size = 0x8, scoped, tag = 'scoped memory for _fwd_unpadded.1']
    #allocation6 [shape = 'u8[65536]{0}', space=vmem, size = 0x10000, scoped, tag = 'input window, operand 5, single buffered']
    #allocation7 [shape = 's32[1]{0}', space=sflag, size = 0x4, scoped, tag = 'scoped memory for _fwd_unpadded.1']
    #allocation8 [shape = 'u8[65536]{0}', space=vmem, size = 0x10000, scoped, tag = 'input window, operand 7, single buffered']
    #allocation9 [shape = 'u8[65536]{0}', space=vmem, size = 0x10000, scoped, tag = 'input window, operand 9, single buffered']
    #allocation10 [shape = 's32[1]{0}', space=sflag, size = 0x4, scoped, tag = 'scoped memory for _fwd_unpadded.1']
    #allocation11 [shape = 'u8[8192]{0}', space=vmem, size = 0x2000, scoped, tag = 'output window, operand 0']
    %17 = vsyncpa [#allocation4], 0
    %18 = vsyncpa [#allocation7], 0
    %19 = vsyncpa [#allocation10], 0
    %20 = vsyncpa [#allocation5], 0
    %s21 = scalar_lea.sflag [#allocation5], 1
    %22 = vsyncpa %s21, 0
    loop: start=0, step=1, limit=4
    $region2: #{_fwd_unpadded.1} parent=1 // loop_pre_header
      _
    $region3: #{_fwd_unpadded.1} parent=1 // loop_header
      %s24 = sphi 0, %s28
      %p25 = scmp.ge.s32.totalorder %s24, 4
      %s32 = sphi 0, %s32
      %s34 = sphi 0, %s32
      %s35 = sphi 0, %s34
      %s49 = sphi 0, %s35
      %s55 = sphi 0, %s57
      %s58 = sphi 0, %s55
      %s59 = sphi 0, %s58
      %s75 = sphi 0, %s59
      %s79 = sphi 0, %s79
      %s81 = sphi 0, %s79
      %s82 = sphi 0, %s81
      %s96 = sphi 0, %s82
      %s100 = sphi 0, %s100
      %s102 = sphi 0, %s100
      %s103 = sphi 0, %s102
      %s117 = sphi 0, %s103
      %s121 = sphi 0, %s121
      %s123 = sphi 0, %s121
      %s124 = sphi 0, %s123
      %s138 = sphi 0, %s124
      %s142 = sphi 0, %s142
      %s144 = sphi 0, %s142
      %s145 = sphi 0, %s144
      %s159 = sphi 0, %s145
      %s163 = sphi 0, %s163
      %s165 = sphi 0, %s163
      %s166 = sphi 0, %s165
      %s180 = sphi 0, %s166
      %s184 = sphi 0, %s184
      %s186 = sphi 0, %s184
      %s187 = sphi 0, %s186
      %s201 = sphi 0, %s187
      %s205 = sphi 0, %s205
      %s207 = sphi 0, %s205
      %s208 = sphi 0, %s207
      %s222 = sphi 0, %s208
      %s226 = sphi 0, %s226
      %s228 = sphi 0, %s226
      %s229 = sphi 0, %s228
      %s243 = sphi 0, %s229
      %s247 = sphi 0, %s247
      %s249 = sphi 0, %s247
      %s250 = sphi 0, %s249
      %s264 = sphi 0, %s250
      %s270 = sphi 0, %s272
      %s273 = sphi 0, %s270
      %s274 = sphi 0, %s273
      %s290 = sphi 0, %s274
    $region4: #{_fwd_unpadded.1} parent=1 // loop_header_branch
      %27 = sbr.rel (%p25) target = $region8
    $region5: #{_fwd_unpadded.1} parent=1 // loop_body
      %s29 = ssub.s32 %s24, 1
      %s30 = ssub.s32 %s24, 2
      %s31 = sadd.s32 %s24, 1
      %s33 = sadd.s32 %s32, 1
      %p36 = scmp.eq.s32.totalorder %s24, 1
      %p37 = scmp.ne.s32.totalorder %s32, %s34
      %p38 = scmp.eq.s32.totalorder %s24, 0
      %p39 = por %p37, %p38
      %p40 = scmp.ne.s32.totalorder %s32, %s34
      %p41 = scmp.eq.s32.totalorder %s29, 1
      %p42 = por %p40, %p41
      %p43 = scmp.ne.s32.totalorder %s34, %s35
      %p44 = scmp.eq.s32.totalorder %s29, 0
      %p45 = por %p43, %p44
      %p46 = scmp.ne.s32.totalorder %s34, %s35
      %p47 = scmp.eq.s32.totalorder %s30, 1
      %p48 = por %p46, %p47
      %p50 = scmp.ne.s32.totalorder %s35, %s49
      %p51 = scmp.eq.s32.totalorder %s30, 0
      %p52 = por %p50, %p51
      %s53 = ssub.s32 %s24, %s31
      %p54 = scmp.eq.s32.totalorder %s53, 0
      %s56 = sadd.s32 %s55, 1
      %s57 = scalar_select %p54, %s55, %s56
      %p60 = pneg %p54
      %p61 = scmp.eq.s32.totalorder %s24, 1
      %p62 = por %p60, %p61
      %p63 = scmp.ne.s32.totalorder %s55, %s58
      %p64 = scmp.eq.s32.totalorder %s24, 0
      %p65 = por %p63, %p64
      %p66 = scmp.ne.s32.totalorder %s55, %s58
      %p67 = scmp.eq.s32.totalorder %s29, 1
      %p68 = por %p66, %p67
      %p69 = scmp.ne.s32.totalorder %s58, %s59
      %p70 = scmp.eq.s32.totalorder %s29, 0
      %p71 = por %p69, %p70
      %p72 = scmp.ne.s32.totalorder %s58, %s59
      %p73 = scmp.eq.s32.totalorder %s30, 1
      %p74 = por %p72, %p73
      %p76 = scmp.ne.s32.totalorder %s59, %s75
      %p77 = scmp.eq.s32.totalorder %s30, 0
      %p78 = por %p76, %p77
      %s80 = sadd.s32 %s79, 1
      %p83 = scmp.eq.s32.totalorder %s24, 1
      %p84 = scmp.ne.s32.totalorder %s79, %s81
      %p85 = scmp.eq.s32.totalorder %s24, 0
      %p86 = por %p84, %p85
      %p87 = scmp.ne.s32.totalorder %s79, %s81
      %p88 = scmp.eq.s32.totalorder %s29, 1
      %p89 = por %p87, %p88
      %p90 = scmp.ne.s32.totalorder %s81, %s82
      %p91 = scmp.eq.s32.totalorder %s29, 0
      %p92 = por %p90, %p91
      %p93 = scmp.ne.s32.totalorder %s81, %s82
      %p94 = scmp.eq.s32.totalorder %s30, 1
      %p95 = por %p93, %p94
      %p97 = scmp.ne.s32.totalorder %s82, %s96
      %p98 = scmp.eq.s32.totalorder %s30, 0
      %p99 = por %p97, %p98
      %s101 = sadd.s32 %s100, 1
      %p104 = scmp.eq.s32.totalorder %s24, 1
      %p105 = scmp.ne.s32.totalorder %s100, %s102
      %p106 = scmp.eq.s32.totalorder %s24, 0
      %p107 = por %p105, %p106
      %p108 = scmp.ne.s32.totalorder %s100, %s102
      %p109 = scmp.eq.s32.totalorder %s29, 1
      %p110 = por %p108, %p109
      %p111 = scmp.ne.s32.totalorder %s102, %s103
      %p112 = scmp.eq.s32.totalorder %s29, 0
      %p113 = por %p111, %p112
      %p114 = scmp.ne.s32.totalorder %s102, %s103
      %p115 = scmp.eq.s32.totalorder %s30, 1
      %p116 = por %p114, %p115
      %p118 = scmp.ne.s32.totalorder %s103, %s117
      %p119 = scmp.eq.s32.totalorder %s30, 0
      %p120 = por %p118, %p119
      %s122 = sadd.s32 %s121, 1
      %p125 = scmp.eq.s32.totalorder %s24, 1
      %p126 = scmp.ne.s32.totalorder %s121, %s123
      %p127 = scmp.eq.s32.totalorder %s24, 0
      %p128 = por %p126, %p127
      %p129 = scmp.ne.s32.totalorder %s121, %s123
      %p130 = scmp.eq.s32.totalorder %s29, 1
      %p131 = por %p129, %p130
      %p132 = scmp.ne.s32.totalorder %s123, %s124
      %p133 = scmp.eq.s32.totalorder %s29, 0
      %p134 = por %p132, %p133
      %p135 = scmp.ne.s32.totalorder %s123, %s124
      %p136 = scmp.eq.s32.totalorder %s30, 1
      %p137 = por %p135, %p136
      %p139 = scmp.ne.s32.totalorder %s124, %s138
      %p140 = scmp.eq.s32.totalorder %s30, 0
      %p141 = por %p139, %p140
      %s143 = sadd.s32 %s142, 1
      %p146 = scmp.eq.s32.totalorder %s24, 1
      %p147 = scmp.ne.s32.totalorder %s142, %s144
      %p148 = scmp.eq.s32.totalorder %s24, 0
      %p149 = por %p147, %p148
      %p150 = scmp.ne.s32.totalorder %s142, %s144
      %p151 = scmp.eq.s32.totalorder %s29, 1
      %p152 = por %p150, %p151
      %p153 = scmp.ne.s32.totalorder %s144, %s145
      %p154 = scmp.eq.s32.totalorder %s29, 0
      %p155 = por %p153, %p154
      %p156 = scmp.ne.s32.totalorder %s144, %s145
      %p157 = scmp.eq.s32.totalorder %s30, 1
      %p158 = por %p156, %p157
      %p160 = scmp.ne.s32.totalorder %s145, %s159
      %p161 = scmp.eq.s32.totalorder %s30, 0
      %p162 = por %p160, %p161
      %s164 = sadd.s32 %s163, 1
      %p167 = scmp.eq.s32.totalorder %s24, 1
      %p168 = scmp.ne.s32.totalorder %s163, %s165
      %p169 = scmp.eq.s32.totalorder %s24, 0
      %p170 = por %p168, %p169
      %p171 = scmp.ne.s32.totalorder %s163, %s165
      %p172 = scmp.eq.s32.totalorder %s29, 1
      %p173 = por %p171, %p172
      %p174 = scmp.ne.s32.totalorder %s165, %s166
      %p175 = scmp.eq.s32.totalorder %s29, 0
      %p176 = por %p174, %p175
      %p177 = scmp.ne.s32.totalorder %s165, %s166
      %p178 = scmp.eq.s32.totalorder %s30, 1
      %p179 = por %p177, %p178
      %p181 = scmp.ne.s32.totalorder %s166, %s180
      %p182 = scmp.eq.s32.totalorder %s30, 0
      %p183 = por %p181, %p182
      %s185 = sadd.s32 %s184, 1
      %p188 = scmp.eq.s32.totalorder %s24, 1
      %p189 = scmp.ne.s32.totalorder %s184, %s186
      %p190 = scmp.eq.s32.totalorder %s24, 0
      %p191 = por %p189, %p190
      %p192 = scmp.ne.s32.totalorder %s184, %s186
      %p193 = scmp.eq.s32.totalorder %s29, 1
      %p194 = por %p192, %p193
      %p195 = scmp.ne.s32.totalorder %s186, %s187
      %p196 = scmp.eq.s32.totalorder %s29, 0
      %p197 = por %p195, %p196
      %p198 = scmp.ne.s32.totalorder %s186, %s187
      %p199 = scmp.eq.s32.totalorder %s30, 1
      %p200 = por %p198, %p199
      %p202 = scmp.ne.s32.totalorder %s187, %s201
      %p203 = scmp.eq.s32.totalorder %s30, 0
      %p204 = por %p202, %p203
      %s206 = sadd.s32 %s205, 1
      %p209 = scmp.eq.s32.totalorder %s24, 1
      %p210 = scmp.ne.s32.totalorder %s205, %s207
      %p211 = scmp.eq.s32.totalorder %s24, 0
      %p212 = por %p210, %p211
      %p213 = scmp.ne.s32.totalorder %s205, %s207
      %p214 = scmp.eq.s32.totalorder %s29, 1
      %p215 = por %p213, %p214
      %p216 = scmp.ne.s32.totalorder %s207, %s208
      %p217 = scmp.eq.s32.totalorder %s29, 0
      %p218 = por %p216, %p217
      %p219 = scmp.ne.s32.totalorder %s207, %s208
      %p220 = scmp.eq.s32.totalorder %s30, 1
      %p221 = por %p219, %p220
      %p223 = scmp.ne.s32.totalorder %s208, %s222
      %p224 = scmp.eq.s32.totalorder %s30, 0
      %p225 = por %p223, %p224
      %s227 = sadd.s32 %s226, 1
      %p230 = scmp.eq.s32.totalorder %s24, 1
      %p231 = scmp.ne.s32.totalorder %s226, %s228
      %p232 = scmp.eq.s32.totalorder %s24, 0
      %p233 = por %p231, %p232
      %p234 = scmp.ne.s32.totalorder %s226, %s228
      %p235 = scmp.eq.s32.totalorder %s29, 1
      %p236 = por %p234, %p235
      %p237 = scmp.ne.s32.totalorder %s228, %s229
      %p238 = scmp.eq.s32.totalorder %s29, 0
      %p239 = por %p237, %p238
      %p240 = scmp.ne.s32.totalorder %s228, %s229
      %p241 = scmp.eq.s32.totalorder %s30, 1
      %p242 = por %p240, %p241
      %p244 = scmp.ne.s32.totalorder %s229, %s243
      %p245 = scmp.eq.s32.totalorder %s30, 0
      %p246 = por %p244, %p245
      %s248 = sadd.s32 %s247, 1
      %p251 = scmp.eq.s32.totalorder %s24, 1
      %p252 = scmp.ne.s32.totalorder %s247, %s249
      %p253 = scmp.eq.s32.totalorder %s24, 0
      %p254 = por %p252, %p253
      %p255 = scmp.ne.s32.totalorder %s247, %s249
      %p256 = scmp.eq.s32.totalorder %s29, 1
      %p257 = por %p255, %p256
      %p258 = scmp.ne.s32.totalorder %s249, %s250
      %p259 = scmp.eq.s32.totalorder %s29, 0
      %p260 = por %p258, %p259
      %p261 = scmp.ne.s32.totalorder %s249, %s250
      %p262 = scmp.eq.s32.totalorder %s30, 1
      %p263 = por %p261, %p262
      %p265 = scmp.ne.s32.totalorder %s250, %s264
      %p266 = scmp.eq.s32.totalorder %s30, 0
      %p267 = por %p265, %p266
      %s268 = ssub.s32 %s24, %s31
      %p269 = scmp.eq.s32.totalorder %s268, 0
      %s271 = sadd.s32 %s270, 1
      %s272 = scalar_select %p269, %s270, %s271
      %p275 = pneg %p269
      %p276 = scmp.eq.s32.totalorder %s24, 1
      %p277 = por %p275, %p276
      %p278 = scmp.ne.s32.totalorder %s270, %s273
      %p279 = scmp.eq.s32.totalorder %s24, 0
      %p280 = por %p278, %p279
      %p281 = scmp.ne.s32.totalorder %s270, %s273
      %p282 = scmp.eq.s32.totalorder %s29, 1
      %p283 = por %p281, %p282
      %p284 = scmp.ne.s32.totalorder %s273, %s274
      %p285 = scmp.eq.s32.totalorder %s29, 0
      %p286 = por %p284, %p285
      %p287 = scmp.ne.s32.totalorder %s273, %s274
      %p288 = scmp.eq.s32.totalorder %s30, 1
      %p289 = por %p287, %p288
      %p291 = scmp.ne.s32.totalorder %s274, %s290
      %p292 = scmp.eq.s32.totalorder %s30, 0
      %p293 = por %p291, %p292
      %p294 = scmp.le.s32.totalorder 1, %s24
      %p295 = scmp.lt.s32.totalorder %s24, 3
      %p296 = pnand %p294, %p295
      %p297 = pneg %p296
      // Predicated region
      $region9: #{_fwd_unpadded.1} parent=5 // pred_check
        _
      $region10: #{_fwd_unpadded.1} parent=5 // pred_check_branch
        %299 = sbr.rel (%p296) target = $region12
      $region11: #{_fwd_unpadded.1} parent=5 // pred_region
        %s300 = ssub.s32 %s24, 1
        // Predicated region
        $region13: #{_fwd_unpadded.1} parent=11 // pred_check
          %p301 = pneg %p45
        $region14: #{_fwd_unpadded.1} parent=11 // pred_check_branch
          %303 = sbr.rel (%p301) target = $region16
        $region15: #{_fwd_unpadded.1} parent=11 // pred_region
          _
        $region16: #{_fwd_unpadded.1} parent=11 // pred_fallthru
          _
        // Predicated region
        $region17: #{_fwd_unpadded.1} parent=11 // pred_check
          %p304 = pneg %p92
        $region18: #{_fwd_unpadded.1} parent=11 // pred_check_branch
          %306 = sbr.rel (%p304) target = $region20
        $region19: #{_fwd_unpadded.1} parent=11 // pred_region
          _
        $region20: #{_fwd_unpadded.1} parent=11 // pred_fallthru
          _
        // Predicated region
        $region21: #{_fwd_unpadded.1} parent=11 // pred_check
          %p307 = pneg %p113
        $region22: #{_fwd_unpadded.1} parent=11 // pred_check_branch
          %309 = sbr.rel (%p307) target = $region24
        $region23: #{_fwd_unpadded.1} parent=11 // pred_region
          %s311 = ssub.s32 2048, 2048
          %312 = vsyncadd [#allocation4], %s311
          %s313 = sshll.u32 [#allocation3], 4
          %s314 = int_to_ptr.vmem [resolvable:$true] %s313
          %319 = dma.hbm_to_vmem [thread:$0]  %s3, 2048, %s314, [#allocation4], 128, 128, 8
        $region24: #{_fwd_unpadded.1} parent=11 // pred_fallthru
          _
        // Predicated region
        $region25: #{_fwd_unpadded.1} parent=11 // pred_check
          %p320 = pneg %p134
        $region26: #{_fwd_unpadded.1} parent=11 // pred_check_branch
          %322 = sbr.rel (%p320) target = $region28
        $region27: #{_fwd_unpadded.1} parent=11 // pred_region
          _
        $region28: #{_fwd_unpadded.1} parent=11 // pred_fallthru
          _
        // Predicated region
        $region29: #{_fwd_unpadded.1} parent=11 // pred_check
          %p323 = pneg %p155
        $region30: #{_fwd_unpadded.1} parent=11 // pred_check_branch
          %325 = sbr.rel (%p323) target = $region32
        $region31: #{_fwd_unpadded.1} parent=11 // pred_region
          %s327 = ssub.s32 2048, 2048
          %328 = vsyncadd [#allocation7], %s327
          %s329 = sshll.u32 [#allocation6], 4
          %s330 = int_to_ptr.vmem [resolvable:$true] %s329
          %335 = dma.hbm_to_vmem [thread:$0]  %s5, 2048, %s330, [#allocation7], 128, 128, 8
        $region32: #{_fwd_unpadded.1} parent=11 // pred_fallthru
          _
        // Predicated region
        $region33: #{_fwd_unpadded.1} parent=11 // pred_check
          %p336 = pneg %p176
        $region34: #{_fwd_unpadded.1} parent=11 // pred_check_branch
          %338 = sbr.rel (%p336) target = $region36
        $region35: #{_fwd_unpadded.1} parent=11 // pred_region
          _
        $region36: #{_fwd_unpadded.1} parent=11 // pred_fallthru
          _
        // Predicated region
        $region37: #{_fwd_unpadded.1} parent=11 // pred_check
          %p339 = pneg %p197
        $region38: #{_fwd_unpadded.1} parent=11 // pred_check_branch
          %341 = sbr.rel (%p339) target = $region40
        $region39: #{_fwd_unpadded.1} parent=11 // pred_region
          %s343 = ssub.s32 2048, 2048
          %344 = vsyncadd [#allocation7], %s343
          %s345 = sshll.u32 [#allocation8], 4
          %s346 = int_to_ptr.vmem [resolvable:$true] %s345
          %351 = dma.hbm_to_vmem [thread:$0]  %s7, 2048, %s346, [#allocation7], 128, 128, 8
        $region40: #{_fwd_unpadded.1} parent=11 // pred_fallthru
          _
        // Predicated region
        $region41: #{_fwd_unpadded.1} parent=11 // pred_check
          %p352 = pneg %p218
        $region42: #{_fwd_unpadded.1} parent=11 // pred_check_branch
          %354 = sbr.rel (%p352) target = $region44
        $region43: #{_fwd_unpadded.1} parent=11 // pred_region
          _
        $region44: #{_fwd_unpadded.1} parent=11 // pred_fallthru
          _
        // Predicated region
        $region45: #{_fwd_unpadded.1} parent=11 // pred_check
          %p355 = pneg %p239
        $region46: #{_fwd_unpadded.1} parent=11 // pred_check_branch
          %357 = sbr.rel (%p355) target = $region48
        $region47: #{_fwd_unpadded.1} parent=11 // pred_region
          %s359 = ssub.s32 2048, 2048
          %360 = vsyncadd [#allocation10], %s359
          %s361 = sshll.u32 [#allocation9], 4
          %s362 = int_to_ptr.vmem [resolvable:$true] %s361
          %367 = dma.hbm_to_vmem [thread:$0]  %s9, 2048, %s362, [#allocation10], 128, 128, 8
        $region48: #{_fwd_unpadded.1} parent=11 // pred_fallthru
          _
        // Predicated region
        $region49: #{_fwd_unpadded.1} parent=11 // pred_check
          %p368 = pneg %p260
        $region50: #{_fwd_unpadded.1} parent=11 // pred_check_branch
          %370 = sbr.rel (%p368) target = $region52
        $region51: #{_fwd_unpadded.1} parent=11 // pred_region
          _
        $region52: #{_fwd_unpadded.1} parent=11 // pred_fallthru
          _
      $region12: #{_fwd_unpadded.1} parent=5 // pred_fallthru
        _
      %p371 = scmp.lt.s32.totalorder %s24, 2
      // Predicated region
      $region53: #{_fwd_unpadded.1} parent=5 // pred_check
        %p372 = pneg %p371
      $region54: #{_fwd_unpadded.1} parent=5 // pred_check_branch
        %374 = sbr.rel (%p372) target = $region56
      $region55: #{_fwd_unpadded.1} parent=5 // pred_region
        // Predicated region
        $region57: #{_fwd_unpadded.1} parent=55 // pred_check
          %p375 = pneg %p65
        $region58: #{_fwd_unpadded.1} parent=55 // pred_check_branch
          %377 = sbr.rel (%p375) target = $region60
        $region59: #{_fwd_unpadded.1} parent=55 // pred_region
          %p378 = scmp.lt.s32.totalorder %s24, 1
          %s379 = scalar_select %p378, %s24, 1
          %s380 = smul.addr %s379, 8
          %s381 = scalar_lea.vmem %s1, %s380
        $region60: #{_fwd_unpadded.1} parent=55 // pred_fallthru
          _
      $region56: #{_fwd_unpadded.1} parent=5 // pred_fallthru
        _
      %p382 = scmp.le.s32.totalorder 1, %s24
      %p383 = scmp.lt.s32.totalorder %s24, 3
      %p384 = pnand %p382, %p383
      %p385 = pneg %p384
      // Predicated region
      $region61: #{_fwd_unpadded.1} parent=5 // pred_check
        _
      $region62: #{_fwd_unpadded.1} parent=5 // pred_check_branch
        %387 = sbr.rel (%p384) target = $region64
      $region63: #{_fwd_unpadded.1} parent=5 // pred_region
        %s388 = ssub.s32 %s24, 1
        // Predicated region
        $region65: #{_fwd_unpadded.1} parent=63 // pred_check
          %p389 = pneg %p113
        $region66: #{_fwd_unpadded.1} parent=63 // pred_check_branch
          %391 = sbr.rel (%p389) target = $region68
        $region67: #{_fwd_unpadded.1} parent=63 // pred_region
          %392 = dma.done [#allocation4], 2048
        $region68: #{_fwd_unpadded.1} parent=63 // pred_fallthru
          _
        // Predicated region
        $region69: #{_fwd_unpadded.1} parent=63 // pred_check
          %p393 = pneg %p155
        $region70: #{_fwd_unpadded.1} parent=63 // pred_check_branch
          %395 = sbr.rel (%p393) target = $region72
        $region71: #{_fwd_unpadded.1} parent=63 // pred_region
          %396 = dma.done [#allocation7], 2048
        $region72: #{_fwd_unpadded.1} parent=63 // pred_fallthru
          _
        // Predicated region
        $region73: #{_fwd_unpadded.1} parent=63 // pred_check
          %p397 = pneg %p197
        $region74: #{_fwd_unpadded.1} parent=63 // pred_check_branch
          %399 = sbr.rel (%p397) target = $region76
        $region75: #{_fwd_unpadded.1} parent=63 // pred_region
          %400 = dma.done [#allocation7], 2048
        $region76: #{_fwd_unpadded.1} parent=63 // pred_fallthru
          _
        // Predicated region
        $region77: #{_fwd_unpadded.1} parent=63 // pred_check
          %p401 = pneg %p239
        $region78: #{_fwd_unpadded.1} parent=63 // pred_check_branch
          %403 = sbr.rel (%p401) target = $region80
        $region79: #{_fwd_unpadded.1} parent=63 // pred_region
          %404 = dma.done [#allocation10], 2048
        $region80: #{_fwd_unpadded.1} parent=63 // pred_fallthru
          _
        %p405 = pneg %p45
        %p406 = pneg %p42
        %p407 = scmp.lt.s32.totalorder %s29, 1
        %s408 = scalar_select %p407, %s29, 1
        %s409 = smul.addr %s408, 8
        %s410 = scalar_lea.vmem %s1, %s409
        %p411 = pneg %p71
        %p412 = pneg %p68
        %p413 = pneg %p92
        %p414 = pneg %p89
        %p415 = pneg %p113
        %p416 = pneg %p110
        %p417 = pneg %p134
        %p418 = pneg %p131
        %p419 = pneg %p155
        %p420 = pneg %p152
        %p421 = pneg %p176
        %p422 = pneg %p173
        %p423 = pneg %p197
        %p424 = pneg %p194
        %p425 = pneg %p218
        %p426 = pneg %p215
        %p427 = pneg %p239
        %p428 = pneg %p236
        %p429 = pneg %p260
        %p430 = pneg %p257
        %p431 = pneg %p286
        %p432 = pneg %p283
        %s433 = sand.u32 %s273, 1
        %s434 = scalar_lea.sflag [#allocation5], %s433
        %s435 = sand.u32 %s273, 1
        %s436 = smul.addr %s435, 8
        %s437 = scalar_lea.vmem [#allocation11], %s436
        %p438 = scmp.lt.s32.totalorder %s29, 1
        %s439 = scalar_select %p438, %s29, 1
        %s440 = smul.addr %s439, 8
        %s441 = scalar_lea.vmem %s1, %s440
        %s442 = sld [smem:[#allocation2]]
        %v443 = vld [vmem:[%s441] sm:$0xff]
        %v444 = vld [vmem:[#allocation3] sm:$0xff]
        %v445 = vld [vmem:[#allocation3 + $0x8] sm:$0xff]
        %v446 = vld [vmem:[#allocation3 + $0x10] sm:$0xff]
        %v447 = vld [vmem:[#allocation3 + $0x18] sm:$0xff]
        %v448 = vld [vmem:[#allocation3 + $0x20] sm:$0xff]
        %v449 = vld [vmem:[#allocation3 + $0x28] sm:$0xff]
        %v450 = vld [vmem:[#allocation3 + $0x30] sm:$0xff]
        %v451 = vld [vmem:[#allocation3 + $0x38] sm:$0xff]
        %v452 = vld [vmem:[#allocation3 + $0x40] sm:$0xff]
        %v453 = vld [vmem:[#allocation3 + $0x48] sm:$0xff]
        %v454 = vld [vmem:[#allocation3 + $0x50] sm:$0xff]
        %v455 = vld [vmem:[#allocation3 + $0x58] sm:$0xff]
        %v456 = vld [vmem:[#allocation3 + $0x60] sm:$0xff]
        %v457 = vld [vmem:[#allocation3 + $0x68] sm:$0xff]
        %v458 = vld [vmem:[#allocation3 + $0x70] sm:$0xff]
        %v459 = vld [vmem:[#allocation3 + $0x78] sm:$0xff]
        %v460 = vld [vmem:[%s2] sm:$0x1]
        %v461 = vstv %s442
        %v462 = vmul.f32 %v461, %v460
        %v464 = vlaneseq
        %v465 = vshrl.u32 %v464, 7
        %v466 = vsub.s32 0, %v465
        %v467 = vrot.slane %v462, %v466
        %469 = vmatprep.subr.mxu0 0.0
        %470 = vmatpush1.msra.mxu0 %v444
        %471 = vmatprep.subr.mxu0 0.0
        %472 = vmatpush1.msra.mxu0 %v445
        %473 = vmatprep.subr.mxu0 0.0
        %474 = vmatpush1.msra.mxu0 %v446
        %475 = vmatprep.subr.mxu0 0.0
        %476 = vmatpush1.msra.mxu0 %v447
        %477 = vmatprep.subr.mxu0 0.0
        %478 = vmatpush1.msra.mxu0 %v448
        %479 = vmatprep.subr.mxu0 0.0
        %480 = vmatpush1.msra.mxu0 %v449
        %481 = vmatprep.subr.mxu0 0.0
        %482 = vmatpush1.msra.mxu0 %v450
        %483 = vmatprep.subr.mxu0 0.0
        %484 = vmatpush1.msra.mxu0 %v451
        %485 = vmatprep.subr.mxu0 0.0
        %486 = vmatpush1.msra.mxu0 %v452
        %487 = vmatprep.subr.mxu0 0.0
        %488 = vmatpush1.msra.mxu0 %v453
        %489 = vmatprep.subr.mxu0 0.0
        %490 = vmatpush1.msra.mxu0 %v454
        %491 = vmatprep.subr.mxu0 0.0
        %492 = vmatpush1.msra.mxu0 %v455
        %493 = vmatprep.subr.mxu0 0.0
        %494 = vmatpush1.msra.mxu0 %v456
        %495 = vmatprep.subr.mxu0 0.0
        %496 = vmatpush1.msra.mxu0 %v457
        %497 = vmatprep.subr.mxu0 0.0
        %498 = vmatpush1.msra.mxu0 %v458
        %499 = vmatprep.subr.mxu0 0.0
        %500 = vmatpush1.msra.mxu0 %v459
        %501 = vmatprep.subr.mxu0 0.0
        %502 = vmatpush1.msra.mxu0 0.0
        %503 = vmatprep.subr.mxu0 0.0
        %504 = vmatpush1.msra.mxu0 0.0
        %505 = vmatprep.subr.mxu0 0.0
        %506 = vmatpush1.msra.mxu0 0.0
        %507 = vmatprep.subr.mxu0 0.0
        %508 = vmatpush1.msra.mxu0 0.0
        %509 = vmatprep.subr.mxu0 0.0
        %510 = vmatpush1.msra.mxu0 0.0
        %511 = vmatprep.subr.mxu0 0.0
        %512 = vmatpush1.msra.mxu0 0.0
        %513 = vmatprep.subr.mxu0 0.0
        %514 = vmatpush1.msra.mxu0 0.0
        %515 = vmatprep.subr.mxu0 0.0
        %516 = vmatpush1.msra.mxu0 0.0
        %517 = vmatprep.subr.mxu0 0.0
        %518 = vmatpush1.msra.mxu0 0.0
        %519 = vmatprep.subr.mxu0 0.0
        %520 = vmatpush1.msra.mxu0 0.0
        %521 = vmatprep.subr.mxu0 0.0
        %522 = vmatpush1.msra.mxu0 0.0
        %523 = vmatprep.subr.mxu0 0.0
        %524 = vmatpush1.msra.mxu0 0.0
        %525 = vmatprep.subr.mxu0 0.0
        %526 = vmatpush1.msra.mxu0 0.0
        %527 = vmatprep.subr.mxu0 0.0
        %528 = vmatpush1.msra.mxu0 0.0
        %529 = vmatprep.subr.mxu0 0.0
        %530 = vmatpush1.msra.mxu0 0.0
        %531 = vmatprep.subr.mxu0 0.0
        %532 = vmatpush1.msra.mxu0 0.0
        %533 = vmatprep.mubr.f32.mxu0 0.0
        %534 = vmatmul.mubr.f32.gmra.mrb[0].mxu0 %v443
        %v535 = vpop.f32.mrb[0].mxu0
        %v536 = vadd.f32 %v467, %v535
        %v537 = vpop.f32.mrb[0].mxu0
        %538 = vdwg.mxu0
        %v539 = vld [vmem:[%s4] sm:$0x1]
        %v541 = vlaneseq
        %v542 = vshrl.u32 %v541, 7
        %v543 = vsub.s32 0, %v542
        %v544 = vrot.slane %v539, %v543
        %v546 = vadd.f32 %v536, %v544
        %v547 = vld [vmem:[#allocation6] sm:$0xff]
        %v548 = vld [vmem:[#allocation6 + $0x8] sm:$0xff]
        %v549 = vld [vmem:[#allocation6 + $0x10] sm:$0xff]
        %v550 = vld [vmem:[#allocation6 + $0x18] sm:$0xff]
        %v551 = vld [vmem:[#allocation6 + $0x20] sm:$0xff]
        %v552 = vld [vmem:[#allocation6 + $0x28] sm:$0xff]
        %v553 = vld [vmem:[#allocation6 + $0x30] sm:$0xff]
        %v554 = vld [vmem:[#allocation6 + $0x38] sm:$0xff]
        %v555 = vld [vmem:[#allocation6 + $0x40] sm:$0xff]
        %v556 = vld [vmem:[#allocation6 + $0x48] sm:$0xff]
        %v557 = vld [vmem:[#allocation6 + $0x50] sm:$0xff]
        %v558 = vld [vmem:[#allocation6 + $0x58] sm:$0xff]
        %v559 = vld [vmem:[#allocation6 + $0x60] sm:$0xff]
        %v560 = vld [vmem:[#allocation6 + $0x68] sm:$0xff]
        %v561 = vld [vmem:[#allocation6 + $0x70] sm:$0xff]
        %v562 = vld [vmem:[#allocation6 + $0x78] sm:$0xff]
        %v563 = vld [vmem:[%s6] sm:$0x1]
        %v565 = vlaneseq
        %v566 = vshrl.u32 %v565, 7
        %v567 = vsub.s32 0, %v566
        %v568 = vrot.slane %v563, %v567
        %570 = vmatprep.subr.mxu0 0.0
        %571 = vmatpush1.msra.mxu0 %v547
        %572 = vmatprep.subr.mxu0 0.0
        %573 = vmatpush1.msra.mxu0 %v548
        %574 = vmatprep.subr.mxu0 0.0
        %575 = vmatpush1.msra.mxu0 %v549
        %576 = vmatprep.subr.mxu0 0.0
        %577 = vmatpush1.msra.mxu0 %v550
        %578 = vmatprep.subr.mxu0 0.0
        %579 = vmatpush1.msra.mxu0 %v551
        %580 = vmatprep.subr.mxu0 0.0
        %581 = vmatpush1.msra.mxu0 %v552
        %582 = vmatprep.subr.mxu0 0.0
        %583 = vmatpush1.msra.mxu0 %v553
        %584 = vmatprep.subr.mxu0 0.0
        %585 = vmatpush1.msra.mxu0 %v554
        %586 = vmatprep.subr.mxu0 0.0
        %587 = vmatpush1.msra.mxu0 %v555
        %588 = vmatprep.subr.mxu0 0.0
        %589 = vmatpush1.msra.mxu0 %v556
        %590 = vmatprep.subr.mxu0 0.0
        %591 = vmatpush1.msra.mxu0 %v557
        %592 = vmatprep.subr.mxu0 0.0
        %593 = vmatpush1.msra.mxu0 %v558
        %594 = vmatprep.subr.mxu0 0.0
        %595 = vmatpush1.msra.mxu0 %v559
        %596 = vmatprep.subr.mxu0 0.0
        %597 = vmatpush1.msra.mxu0 %v560
        %598 = vmatprep.subr.mxu0 0.0
        %599 = vmatpush1.msra.mxu0 %v561
        %600 = vmatprep.subr.mxu0 0.0
        %601 = vmatpush1.msra.mxu0 %v562
        %602 = vmatprep.subr.mxu0 0.0
        %603 = vmatpush1.msra.mxu0 0.0
        %604 = vmatprep.subr.mxu0 0.0
        %605 = vmatpush1.msra.mxu0 0.0
        %606 = vmatprep.subr.mxu0 0.0
        %607 = vmatpush1.msra.mxu0 0.0
        %608 = vmatprep.subr.mxu0 0.0
        %609 = vmatpush1.msra.mxu0 0.0
        %610 = vmatprep.subr.mxu0 0.0
        %611 = vmatpush1.msra.mxu0 0.0
        %612 = vmatprep.subr.mxu0 0.0
        %613 = vmatpush1.msra.mxu0 0.0
        %614 = vmatprep.subr.mxu0 0.0
        %615 = vmatpush1.msra.mxu0 0.0
        %616 = vmatprep.subr.mxu0 0.0
        %617 = vmatpush1.msra.mxu0 0.0
        %618 = vmatprep.subr.mxu0 0.0
        %619 = vmatpush1.msra.mxu0 0.0
        %620 = vmatprep.subr.mxu0 0.0
        %621 = vmatpush1.msra.mxu0 0.0
        %622 = vmatprep.subr.mxu0 0.0
        %623 = vmatpush1.msra.mxu0 0.0
        %624 = vmatprep.subr.mxu0 0.0
        %625 = vmatpush1.msra.mxu0 0.0
        %626 = vmatprep.subr.mxu0 0.0
        %627 = vmatpush1.msra.mxu0 0.0
        %628 = vmatprep.subr.mxu0 0.0
        %629 = vmatpush1.msra.mxu0 0.0
        %630 = vmatprep.subr.mxu0 0.0
        %631 = vmatpush1.msra.mxu0 0.0
        %632 = vmatprep.subr.mxu0 0.0
        %633 = vmatpush1.msra.mxu0 0.0
        %634 = vmatprep.mubr.f32.mxu0 0.0
        %635 = vmatmul.mubr.f32.gmra.mrb[0].mxu0 %v546
        %v636 = vpop.f32.mrb[0].mxu0
        %v637 = vadd.f32 %v568, %v636
        %v638 = vpop.f32.mrb[0].mxu0
        %639 = vdwg.mxu0
        %v640 = vxor.u32 %v637, 2147483648
        %v641 = vmul.f32 %v640, 1.442695
        %v642 = vpow.pop %v641
        %v643 = vadd.f32 %v642, 1.0
        %v644 = vrcp.pop %v643
        %v645 = vmul.f32 1.0, %v644
        %v646 = vmul.f32 %v637, %v645
        %v647 = vld [vmem:[#allocation8] sm:$0xff]
        %v648 = vld [vmem:[#allocation8 + $0x8] sm:$0xff]
        %v649 = vld [vmem:[#allocation8 + $0x10] sm:$0xff]
        %v650 = vld [vmem:[#allocation8 + $0x18] sm:$0xff]
        %v651 = vld [vmem:[#allocation8 + $0x20] sm:$0xff]
        %v652 = vld [vmem:[#allocation8 + $0x28] sm:$0xff]
        %v653 = vld [vmem:[#allocation8 + $0x30] sm:$0xff]
        %v654 = vld [vmem:[#allocation8 + $0x38] sm:$0xff]
        %v655 = vld [vmem:[#allocation8 + $0x40] sm:$0xff]
        %v656 = vld [vmem:[#allocation8 + $0x48] sm:$0xff]
        %v657 = vld [vmem:[#allocation8 + $0x50] sm:$0xff]
        %v658 = vld [vmem:[#allocation8 + $0x58] sm:$0xff]
        %v659 = vld [vmem:[#allocation8 + $0x60] sm:$0xff]
        %v660 = vld [vmem:[#allocation8 + $0x68] sm:$0xff]
        %v661 = vld [vmem:[#allocation8 + $0x70] sm:$0xff]
        %v662 = vld [vmem:[#allocation8 + $0x78] sm:$0xff]
        %v663 = vld [vmem:[%s8] sm:$0x1]
        %v665 = vlaneseq
        %v666 = vshrl.u32 %v665, 7
        %v667 = vsub.s32 0, %v666
        %v668 = vrot.slane %v663, %v667
        %670 = vmatprep.subr.mxu0 0.0
        %671 = vmatpush1.msra.mxu0 %v647
        %672 = vmatprep.subr.mxu0 0.0
        %673 = vmatpush1.msra.mxu0 %v648
        %674 = vmatprep.subr.mxu0 0.0
        %675 = vmatpush1.msra.mxu0 %v649
        %676 = vmatprep.subr.mxu0 0.0
        %677 = vmatpush1.msra.mxu0 %v650
        %678 = vmatprep.subr.mxu0 0.0
        %679 = vmatpush1.msra.mxu0 %v651
        %680 = vmatprep.subr.mxu0 0.0
        %681 = vmatpush1.msra.mxu0 %v652
        %682 = vmatprep.subr.mxu0 0.0
        %683 = vmatpush1.msra.mxu0 %v653
        %684 = vmatprep.subr.mxu0 0.0
        %685 = vmatpush1.msra.mxu0 %v654
        %686 = vmatprep.subr.mxu0 0.0
        %687 = vmatpush1.msra.mxu0 %v655
        %688 = vmatprep.subr.mxu0 0.0
        %689 = vmatpush1.msra.mxu0 %v656
        %690 = vmatprep.subr.mxu0 0.0
        %691 = vmatpush1.msra.mxu0 %v657
        %692 = vmatprep.subr.mxu0 0.0
        %693 = vmatpush1.msra.mxu0 %v658
        %694 = vmatprep.subr.mxu0 0.0
        %695 = vmatpush1.msra.mxu0 %v659
        %696 = vmatprep.subr.mxu0 0.0
        %697 = vmatpush1.msra.mxu0 %v660
        %698 = vmatprep.subr.mxu0 0.0
        %699 = vmatpush1.msra.mxu0 %v661
        %700 = vmatprep.subr.mxu0 0.0
        %701 = vmatpush1.msra.mxu0 %v662
        %702 = vmatprep.subr.mxu0 0.0
        %703 = vmatpush1.msra.mxu0 0.0
        %704 = vmatprep.subr.mxu0 0.0
        %705 = vmatpush1.msra.mxu0 0.0
        %706 = vmatprep.subr.mxu0 0.0
        %707 = vmatpush1.msra.mxu0 0.0
        %708 = vmatprep.subr.mxu0 0.0
        %709 = vmatpush1.msra.mxu0 0.0
        %710 = vmatprep.subr.mxu0 0.0
        %711 = vmatpush1.msra.mxu0 0.0
        %712 = vmatprep.subr.mxu0 0.0
        %713 = vmatpush1.msra.mxu0 0.0
        %714 = vmatprep.subr.mxu0 0.0
        %715 = vmatpush1.msra.mxu0 0.0
        %716 = vmatprep.subr.mxu0 0.0
        %717 = vmatpush1.msra.mxu0 0.0
        %718 = vmatprep.subr.mxu0 0.0
        %719 = vmatpush1.msra.mxu0 0.0
        %720 = vmatprep.subr.mxu0 0.0
        %721 = vmatpush1.msra.mxu0 0.0
        %722 = vmatprep.subr.mxu0 0.0
        %723 = vmatpush1.msra.mxu0 0.0
        %724 = vmatprep.subr.mxu0 0.0
        %725 = vmatpush1.msra.mxu0 0.0
        %726 = vmatprep.subr.mxu0 0.0
        %727 = vmatpush1.msra.mxu0 0.0
        %728 = vmatprep.subr.mxu0 0.0
        %729 = vmatpush1.msra.mxu0 0.0
        %730 = vmatprep.subr.mxu0 0.0
        %731 = vmatpush1.msra.mxu0 0.0
        %732 = vmatprep.subr.mxu0 0.0
        %733 = vmatpush1.msra.mxu0 0.0
        %734 = vmatprep.mubr.f32.mxu0 0.0
        %735 = vmatmul.mubr.f32.gmra.mrb[0].mxu0 %v646
        %v736 = vpop.f32.mrb[0].mxu0
        %v737 = vadd.f32 %v668, %v736
        %v738 = vpop.f32.mrb[0].mxu0
        %739 = vdwg.mxu0
        %v740 = vxor.u32 %v737, 2147483648
        %v741 = vmul.f32 %v740, 1.442695
        %v742 = vpow.pop %v741
        %v743 = vadd.f32 %v742, 1.0
        %v744 = vrcp.pop %v743
        %v745 = vmul.f32 1.0, %v744
        %v746 = vmul.f32 %v737, %v745
        %v747 = vld [vmem:[#allocation9] sm:$0xff]
        %v748 = vld [vmem:[#allocation9 + $0x8] sm:$0xff]
        %v749 = vld [vmem:[#allocation9 + $0x10] sm:$0xff]
        %v750 = vld [vmem:[#allocation9 + $0x18] sm:$0xff]
        %v751 = vld [vmem:[#allocation9 + $0x20] sm:$0xff]
        %v752 = vld [vmem:[#allocation9 + $0x28] sm:$0xff]
        %v753 = vld [vmem:[#allocation9 + $0x30] sm:$0xff]
        %v754 = vld [vmem:[#allocation9 + $0x38] sm:$0xff]
        %v755 = vld [vmem:[#allocation9 + $0x40] sm:$0xff]
        %v756 = vld [vmem:[#allocation9 + $0x48] sm:$0xff]
        %v757 = vld [vmem:[#allocation9 + $0x50] sm:$0xff]
        %v758 = vld [vmem:[#allocation9 + $0x58] sm:$0xff]
        %v759 = vld [vmem:[#allocation9 + $0x60] sm:$0xff]
        %v760 = vld [vmem:[#allocation9 + $0x68] sm:$0xff]
        %v761 = vld [vmem:[#allocation9 + $0x70] sm:$0xff]
        %v762 = vld [vmem:[#allocation9 + $0x78] sm:$0xff]
        %v763 = vld [vmem:[%s10] sm:$0x1]
        %v765 = vlaneseq
        %v766 = vshrl.u32 %v765, 7
        %v767 = vsub.s32 0, %v766
        %v768 = vrot.slane %v763, %v767
        %770 = vmatprep.subr.mxu0 0.0
        %771 = vmatpush1.msra.mxu0 %v747
        %772 = vmatprep.subr.mxu0 0.0
        %773 = vmatpush1.msra.mxu0 %v748
        %774 = vmatprep.subr.mxu0 0.0
        %775 = vmatpush1.msra.mxu0 %v749
        %776 = vmatprep.subr.mxu0 0.0
        %777 = vmatpush1.msra.mxu0 %v750
        %778 = vmatprep.subr.mxu0 0.0
        %779 = vmatpush1.msra.mxu0 %v751
        %780 = vmatprep.subr.mxu0 0.0
        %781 = vmatpush1.msra.mxu0 %v752
        %782 = vmatprep.subr.mxu0 0.0
        %783 = vmatpush1.msra.mxu0 %v753
        %784 = vmatprep.subr.mxu0 0.0
        %785 = vmatpush1.msra.mxu0 %v754
        %786 = vmatprep.subr.mxu0 0.0
        %787 = vmatpush1.msra.mxu0 %v755
        %788 = vmatprep.subr.mxu0 0.0
        %789 = vmatpush1.msra.mxu0 %v756
        %790 = vmatprep.subr.mxu0 0.0
        %791 = vmatpush1.msra.mxu0 %v757
        %792 = vmatprep.subr.mxu0 0.0
        %793 = vmatpush1.msra.mxu0 %v758
        %794 = vmatprep.subr.mxu0 0.0
        %795 = vmatpush1.msra.mxu0 %v759
        %796 = vmatprep.subr.mxu0 0.0
        %797 = vmatpush1.msra.mxu0 %v760
        %798 = vmatprep.subr.mxu0 0.0
        %799 = vmatpush1.msra.mxu0 %v761
        %800 = vmatprep.subr.mxu0 0.0
        %801 = vmatpush1.msra.mxu0 %v762
        %802 = vmatprep.subr.mxu0 0.0
        %803 = vmatpush1.msra.mxu0 0.0
        %804 = vmatprep.subr.mxu0 0.0
        %805 = vmatpush1.msra.mxu0 0.0
        %806 = vmatprep.subr.mxu0 0.0
        %807 = vmatpush1.msra.mxu0 0.0
        %808 = vmatprep.subr.mxu0 0.0
        %809 = vmatpush1.msra.mxu0 0.0
        %810 = vmatprep.subr.mxu0 0.0
        %811 = vmatpush1.msra.mxu0 0.0
        %812 = vmatprep.subr.mxu0 0.0
        %813 = vmatpush1.msra.mxu0 0.0
        %814 = vmatprep.subr.mxu0 0.0
        %815 = vmatpush1.msra.mxu0 0.0
        %816 = vmatprep.subr.mxu0 0.0
        %817 = vmatpush1.msra.mxu0 0.0
        %818 = vmatprep.subr.mxu0 0.0
        %819 = vmatpush1.msra.mxu0 0.0
        %820 = vmatprep.subr.mxu0 0.0
        %821 = vmatpush1.msra.mxu0 0.0
        %822 = vmatprep.subr.mxu0 0.0
        %823 = vmatpush1.msra.mxu0 0.0
        %824 = vmatprep.subr.mxu0 0.0
        %825 = vmatpush1.msra.mxu0 0.0
        %826 = vmatprep.subr.mxu0 0.0
        %827 = vmatpush1.msra.mxu0 0.0
        %828 = vmatprep.subr.mxu0 0.0
        %829 = vmatpush1.msra.mxu0 0.0
        %830 = vmatprep.subr.mxu0 0.0
        %831 = vmatpush1.msra.mxu0 0.0
        %832 = vmatprep.subr.mxu0 0.0
        %833 = vmatpush1.msra.mxu0 0.0
        %834 = vmatprep.mubr.f32.mxu0 0.0
        %835 = vmatmul.mubr.f32.gmra.mrb[0].mxu0 %v746
        %v836 = vpop.f32.mrb[0].mxu0
        %v837 = vadd.f32 %v768, %v836
        %v838 = vpop.f32.mrb[0].mxu0
        %839 = vdwg.mxu0
        %840 = vst [vmem:[%s437] sm:$0xff] %v837
        %s841 = sand.u32 %s273, 1
        %s842 = scalar_lea.sflag [#allocation5], %s841
        %s843 = sand.u32 %s273, 1
        %s844 = smul.addr %s843, 8
        %s845 = scalar_lea.vmem [#allocation11], %s844
        // Predicated region
        $region81: #{_fwd_unpadded.1} parent=63 // pred_check
          %p846 = pneg %p283
        $region82: #{_fwd_unpadded.1} parent=63 // pred_check_branch
          %848 = sbr.rel (%p846) target = $region84
        $region83: #{_fwd_unpadded.1} parent=63 // pred_region
          %s850 = ssub.s32 128, 128
          %851 = vsyncadd %s842, %s850
          %s852 = smul.addr %s29, 128
          %s853 = scalar_lea.hbm %s11, %s852
          %s855 = sshll.u32 %s845, 4
          %s856 = int_to_ptr.vmem [resolvable:$true] %s855
          %858 = dma.vmem_to_hbm [thread:$0]  %s856, 128, %s853, %s842
        $region84: #{_fwd_unpadded.1} parent=63 // pred_fallthru
          _
      $region64: #{_fwd_unpadded.1} parent=5 // pred_fallthru
        _
      %p859 = scmp.le.s32.totalorder 2, %s24
      // Predicated region
      $region85: #{_fwd_unpadded.1} parent=5 // pred_check
        %p860 = pneg %p859
      $region86: #{_fwd_unpadded.1} parent=5 // pred_check_branch
        %862 = sbr.rel (%p860) target = $region88
      $region87: #{_fwd_unpadded.1} parent=5 // pred_region
        %s863 = ssub.s32 %s24, 2
        // Predicated region
        $region89: #{_fwd_unpadded.1} parent=87 // pred_check
          %p864 = pneg %p289
        $region90: #{_fwd_unpadded.1} parent=87 // pred_check_branch
          %866 = sbr.rel (%p864) target = $region92
        $region91: #{_fwd_unpadded.1} parent=87 // pred_region
          %s867 = sand.u32 %s274, 1
          %s868 = scalar_lea.sflag [#allocation5], %s867
          %s869 = sand.u32 %s274, 1
          %s870 = smul.addr %s869, 8
          %s871 = scalar_lea.vmem [#allocation11], %s870
          %872 = dma.done %s868, 128
        $region92: #{_fwd_unpadded.1} parent=87 // pred_fallthru
          _
      $region88: #{_fwd_unpadded.1} parent=5 // pred_fallthru
        _
    $region6: #{_fwd_unpadded.1} parent=1 // loop_footer
      %s28 = sadd.s32 1, %s24
    $region7: #{_fwd_unpadded.1} parent=1 // loop_footer_branch
      %23 = sbr.rel target = $region3
    $region8: #{_fwd_unpadded.1} parent=1 // loop_exit
      _
    %873 = vsyncpa [#allocation4], 1
    %s874 = scalar_lea.sflag [#allocation4], 1
    %875 = vsyncpa %s874, 1
    %876 = vsyncpa [#allocation7], 1
    %877 = vsyncpa [#allocation10], 1
    %878 = vsyncpa [#allocation5], 1
    %s879 = scalar_lea.sflag [#allocation5], 1
    %880 = vsyncpa %s879, 1

</llo_original>
